<compile_context>
chip_gen: v5e
topology: v5e:2x2
jax: 0.10.0
libtpu: 0.0.40
codegen_flags: <defaults>
</compile_context>

<pallas_src>
import functools

import jax
import jax.numpy as jnp
from jax.experimental import pallas as pl
from jax.experimental.pallas import tpu as pltpu


def _round_up(x: int, m: int) -> int:
    return ((x + m - 1) // m) * m


def _vmem_capacity_bytes() -> int:
    """Per-core VMEM capacity; conservative 64 MiB (v7x) fallback."""
    try:
        info = pltpu.get_tpu_info()
        cap = getattr(info, "vmem_capacity_bytes", None)
        if cap:
            return int(cap)
    except Exception:
        pass
    return 64 * 2**20


def _num_tensorcores() -> int:
    """TensorCores the grid can be sharded across (v7x / megacore = 2)."""
    try:
        kind = jax.devices()[0].device_kind.lower()
    except Exception:
        return 1
    for tag in ("v7", "v5p", "v4"):
        if tag in kind:
            return 2
    return 1


def _linearx2_kernel(x_ref, w1_ref, b1_ref, w2_ref, b2_ref, o_ref):
    """One row tile: relu(x @ W1 + b1) @ W2 + b2, bf16 MXU / f32 accumulate."""
    # Cast activations to the weight dtype on the VPU (slack unit here); the
    # MXU accumulates in f32 via preferred_element_type.
    x = x_ref[...].astype(w1_ref.dtype)
    h = jnp.dot(x, w1_ref[...], preferred_element_type=jnp.float32)
    # Bias + ReLU stay in f32 (v5e has no bf16 VPU path).
    h = jnp.maximum(h + b1_ref[...], 0.0)
    y = jnp.dot(h.astype(w2_ref.dtype), w2_ref[...],
                preferred_element_type=jnp.float32)
    o_ref[...] = (y + b2_ref[...]).astype(o_ref.dtype)


def linearx2_pallas(x, w1, b1, w2, b2, *, tm=1024):
    """x: (M, D_in) f32; w1: (D_in, D_hid); w2: (D_hid, L); returns (M, L) f32.

    Weights may be bf16 (recommended, see prepare_fcn_params) or f32; the
    kernel casts activations to the weight dtype before each matmul.
    """
    M, D_in = x.shape
    D_hid, L = w2.shape
    assert w1.shape == (D_in, D_hid)

    row_align = 8                                   # f32 sublane packing
    tm_eff = max(row_align, _round_up(min(tm, M), row_align))

    # Only split the (otherwise sequential) grid when there are multiple
    # TensorCores AND each core gets enough rows to amortize per-step overhead.
    n_tc = _num_tensorcores()
    if n_tc > 1:
        per_core = _round_up(pl.cdiv(M, n_tc), row_align)
        if per_core >= 512:
            tm_eff = min(tm_eff, per_core)

    # VMEM footprint (weights single-buffered; x/out double-buffered; include
    # the in-kernel bf16 recasts and the f32 hidden activation h).
    w_bytes = (w1.size * w1.dtype.itemsize + b1.size * 4
               + w2.size * w2.dtype.itemsize + b2.size * 4)
    per_row_bytes = (2 * D_in * x.dtype.itemsize       # x tile, double-buffered
                     + D_in * w1.dtype.itemsize        # in-kernel x recast
                     + D_hid * 4                       # h (f32)
                     + D_hid * w2.dtype.itemsize       # h recast for 2nd dot
                     + L * 4                           # y (f32)
                     + 2 * L * 4)                      # out tile, double-buffered
    vmem_budget = _vmem_capacity_bytes() // 2          # leave compiler headroom
    while (tm_eff > row_align
           and w_bytes + tm_eff * per_row_bytes > vmem_budget):
        tm_eff = _round_up(tm_eff // 2, row_align)

    grid = (pl.cdiv(M, tm_eff),)                       # ragged edge tile is masked

    b1f = b1.reshape(1, D_hid).astype(jnp.float32)
    b2f = b2.reshape(1, L).astype(jnp.float32)

    # Grid-invariant operands: constant index_map -> single-buffer them.
    const = dict(pipeline_mode=pl.Buffered(1))
    in_specs = [
        pl.BlockSpec((tm_eff, D_in), lambda i: (i, 0)),
        pl.BlockSpec((D_in, D_hid), lambda i: (0, 0), **const),
        pl.BlockSpec((1, D_hid), lambda i: (0, 0), **const),
        pl.BlockSpec((D_hid, L), lambda i: (0, 0), **const),
        pl.BlockSpec((1, L), lambda i: (0, 0), **const),
    ]
    out_spec = pl.BlockSpec((tm_eff, L), lambda i: (i, 0))

    footprint = w_bytes + tm_eff * per_row_bytes
    vmem_limit = int(min(max(2 * footprint, 8 * 2**20), vmem_budget))

    cost = pl.CostEstimate(
        flops=2 * M * (D_in * D_hid + D_hid * L),
        transcendentals=0,
        bytes_accessed=int(M * D_in * x.dtype.itemsize + M * L * 4 + w_bytes),
    )

    return pl.pallas_call(
        _linearx2_kernel,
        out_shape=jax.ShapeDtypeStruct((M, L), jnp.float32),
        grid_spec=pltpu.PrefetchScalarGridSpec(
            num_scalar_prefetch=0,
            grid=grid,
            in_specs=in_specs,
            out_specs=out_spec,
        ),
        compiler_params=pltpu.CompilerParams(
            dimension_semantics=("parallel",),
            vmem_limit_bytes=vmem_limit),
        cost_estimate=cost,
    )(x, w1, b1f, w2, b2f)


def fcn_forward(params, inp, elm_agg_emb=None, *, bypass=True, tm=1024):
    """JAX/Pallas equivalent of FCN.forward.

    inp:          (S, B, d_model)
    elm_agg_emb:  (S, B, d_model) if bypass
    returns:      (B, S, label_num) float32
    """
    S, B, _ = inp.shape
    if bypass:
        assert elm_agg_emb is not None
        # One feature-axis concat (f32) so the kernel sees a single lane-dense
        # K = 2*d_model operand and runs one MXU dot instead of two.
        x = jnp.concatenate((inp, elm_agg_emb), axis=2)
    else:
        x = inp
    D_in = x.shape[-1]
    y = linearx2_pallas(x.reshape(S * B, D_in), params["w1"], params["b1"],
                        params["w2"], params["b2"], tm=tm)
    L = params["w2"].shape[1]
    # Rows are permutation-independent; only the small logits tensor is permuted.
    return jnp.transpose(y.reshape(S, B, L), (1, 0, 2))


def init_fcn_params(key, d_model, label_num, bypass):
    """f32 init matching nn.Linear shapes (uniform +-1/sqrt(fan_in))."""
    D_in = d_model * 2 if bypass else d_model
    k1, k2, k3, k4 = jax.random.split(key, 4)
    lim = 1.0 / jnp.sqrt(D_in)
    return {
        "w1": jax.random.uniform(k1, (D_in, D_in), jnp.float32, -lim, lim),
        "b1": jax.random.uniform(k2, (1, D_in), jnp.float32, -lim, lim),
        "w2": jax.random.uniform(k3, (D_in, label_num), jnp.float32, -lim, lim),
        "b2": jax.random.uniform(k4, (1, label_num), jnp.float32, -lim, lim),
    }


def prepare_fcn_params(params, mxu_dtype=jnp.bfloat16):
    """One-time weight conversion for the kernel (bf16 MXU by default).

    Pass mxu_dtype=jnp.float32 to keep full-precision matmuls.
    """
    D_in = params["w1"].shape[0]
    L = params["w2"].shape[1]
    return {
        "w1": params["w1"].astype(mxu_dtype),
        "b1": params["b1"].reshape(1, D_in).astype(jnp.float32),
        "w2": params["w2"].astype(mxu_dtype),
        "b2": params["b2"].reshape(1, L).astype(jnp.float32),
    }


def _reference_forward_f32(params, inp, elm_agg_emb, bypass):
    """Pure-JAX f32 reference of the PyTorch module."""
    if bypass:
        inp = jnp.concatenate((inp, elm_agg_emb), axis=2)
    x = jnp.transpose(inp, (1, 0, 2))
    h = jnp.maximum(jnp.dot(x, params["w1"]) + params["b1"][0], 0.0)
    return jnp.dot(h, params["w2"]) + params["b2"][0]


def _reference_forward_bf16(params, inp, elm_agg_emb, bypass):
    """Pure-JAX reference mirroring the kernel's bf16-matmul / f32-accumulate."""
    if bypass:
        inp = jnp.concatenate((inp, elm_agg_emb), axis=2)
    x = jnp.transpose(inp, (1, 0, 2)).astype(jnp.bfloat16)
    w1 = params["w1"].astype(jnp.bfloat16)
    w2 = params["w2"].astype(jnp.bfloat16)
    h = jnp.dot(x, w1, preferred_element_type=jnp.float32) + params["b1"][0]
    h = jnp.maximum(h, 0.0).astype(jnp.bfloat16)
    return jnp.dot(h, w2, preferred_element_type=jnp.float32) + params["b2"][0]


if __name__ == "__main__":
    d_model = 64
    label_num = 16
    bypass = True
    seq, batch = 16, 8          # M = S*B = 128 rows

    key = jax.random.PRNGKey(0)
    kp, kx, ke = jax.random.split(key, 3)
    raw_params = init_fcn_params(kp, d_model, label_num, bypass)
    params = prepare_fcn_params(raw_params)        # one-time bf16 weight cast

    inp = jax.random.normal(kx, (seq, batch, d_model), jnp.float32)
    elm_agg_emb = jax.random.normal(ke, (seq, batch, d_model), jnp.float32)

    fwd = jax.jit(functools.partial(fcn_forward, bypass=bypass))
    out = jax.block_until_ready(fwd(params, inp, elm_agg_emb))
    assert out.shape == (batch, seq, label_num), out.shape

    ref_bf16 = _reference_forward_bf16(raw_params, inp, elm_agg_emb, bypass)
    ref_f32 = _reference_forward_f32(raw_params, inp, elm_agg_emb, bypass)
    assert jnp.allclose(out, ref_bf16, atol=5e-3, rtol=5e-3), \
        "mismatch vs bf16-mirrored reference"
    assert jnp.allclose(out, ref_f32, atol=1e-1, rtol=1e-1), \
        "mismatch vs f32 reference"

    # Ragged-M path: M = 63 rows, not a multiple of the 8-row tile alignment
    # (exercises the cdiv grid / masked edge tile, no row padding in wrapper).
    seq2, batch2 = 9, 7
    inp2 = jax.random.normal(kx, (seq2, batch2, d_model), jnp.float32)
    elm2 = jax.random.normal(ke, (seq2, batch2, d_model), jnp.float32)
    out2 = jax.block_until_ready(fwd(params, inp2, elm2))
    assert out2.shape == (batch2, seq2, label_num), out2.shape
    ref2 = _reference_forward_bf16(raw_params, inp2, elm2, bypass)
    assert jnp.allclose(out2, ref2, atol=5e-3, rtol=5e-3), \
        "ragged-M mismatch vs bf16-mirrored reference"

    print("KERNEL_OK")
</pallas_src>

<mosaic_0001>
module attributes {stable_mosaic.version = 11 : i64} {
  func.func @_linearx2_kernel(%arg0: i32, %arg1: memref<128x128xf32, #tpu.memory_space<vmem>>, %arg2: memref<128x128xbf16, #tpu.memory_space<vmem>>, %arg3: memref<1x128xf32, #tpu.memory_space<vmem>>, %arg4: memref<128x16xbf16, #tpu.memory_space<vmem>>, %arg5: memref<1x16xf32, #tpu.memory_space<vmem>>, %arg6: memref<128x16xf32, #tpu.memory_space<vmem>>) attributes {dimension_semantics = [#tpu.dimension_semantics<parallel>], iteration_bounds = array<i64: 1>, scalar_prefetch = 0 : i64, scratch_operands = 0 : i64, tpu.core_type = #tpu.core_type<tc>, window_params = [{transform_indices = @transform_0, window_bounds = array<i64: 128, 128>}, {pipeline_mode = #tpu.pipeline_mode<synchronous>, transform_indices = @transform_1, window_bounds = array<i64: 128, 128>}, {pipeline_mode = #tpu.pipeline_mode<synchronous>, transform_indices = @transform_2, window_bounds = array<i64: 1, 128>}, {pipeline_mode = #tpu.pipeline_mode<synchronous>, transform_indices = @transform_3, window_bounds = array<i64: 128, 16>}, {pipeline_mode = #tpu.pipeline_mode<synchronous>, transform_indices = @transform_4, window_bounds = array<i64: 1, 16>}, {transform_indices = @transform_5, window_bounds = array<i64: 128, 16>}]} {
    %c0 = arith.constant 0 : index
    %c0_0 = arith.constant 0 : index
    %0 = vector.load %arg1[%c0, %c0_0] : memref<128x128xf32, #tpu.memory_space<vmem>>, vector<128x128xf32>
    %1 = arith.truncf %0 : vector<128x128xf32> to vector<128x128xbf16>
    %c0_1 = arith.constant 0 : index
    %c0_2 = arith.constant 0 : index
    %2 = vector.load %arg2[%c0_1, %c0_2] : memref<128x128xbf16, #tpu.memory_space<vmem>>, vector<128x128xbf16>
    %cst = arith.constant dense<0.000000e+00> : vector<128x128xf32>
    %3 = tpu.matmul %1, %2, %cst {dimension_numbers = #tpu.dot_dimension_numbers<[1], [0], [0], [1], [0, 0, 1, 1], [], []>} : vector<128x128xbf16>, vector<128x128xbf16>, vector<128x128xf32> -> vector<128x128xf32>
    %c0_3 = arith.constant 0 : index
    %c0_4 = arith.constant 0 : index
    %4 = vector.load %arg3[%c0_3, %c0_4] : memref<1x128xf32, #tpu.memory_space<vmem>>, vector<1x128xf32>
    %5 = vector.broadcast %4 : vector<1x128xf32> to vector<128x128xf32>
    %6 = arith.addf %3, %5 : vector<128x128xf32>
    %cst_5 = arith.constant 0.000000e+00 : f32
    %7 = vector.broadcast %cst_5 : f32 to vector<128x128xf32>
    %8 = arith.maximumf %6, %7 : vector<128x128xf32>
    %9 = arith.truncf %8 : vector<128x128xf32> to vector<128x128xbf16>
    %c0_6 = arith.constant 0 : index
    %c0_7 = arith.constant 0 : index
    %10 = vector.load %arg4[%c0_6, %c0_7] : memref<128x16xbf16, #tpu.memory_space<vmem>>, vector<128x16xbf16>
    %cst_8 = arith.constant dense<0.000000e+00> : vector<128x16xf32>
    %11 = tpu.matmul %9, %10, %cst_8 {dimension_numbers = #tpu.dot_dimension_numbers<[1], [0], [0], [1], [0, 0, 1, 1], [], []>} : vector<128x128xbf16>, vector<128x16xbf16>, vector<128x16xf32> -> vector<128x16xf32>
    %c0_9 = arith.constant 0 : index
    %c0_10 = arith.constant 0 : index
    %12 = vector.load %arg5[%c0_9, %c0_10] : memref<1x16xf32, #tpu.memory_space<vmem>>, vector<1x16xf32>
    %13 = vector.broadcast %12 : vector<1x16xf32> to vector<128x16xf32>
    %14 = arith.addf %11, %13 : vector<128x16xf32>
    %c0_11 = arith.constant 0 : index
    %c0_12 = arith.constant 0 : index
    %15 = vector.load %arg6[%c0_11, %c0_12] : memref<128x16xf32, #tpu.memory_space<vmem>>, vector<128x16xf32>
    tpu.vector_store %arg6[%c0_11, %c0_12], %14 {strides = array<i32>} : memref<128x16xf32, #tpu.memory_space<vmem>>, vector<128x16xf32>,
    return
  }
  func.func @transform_0(%arg0: i32) -> (i32, i32) {
    %c0_i32 = arith.constant 0 : i32
    %c0_i32_0 = arith.constant 0 : i32
    return %arg0, %c0_i32 : i32, i32
  }
  func.func @transform_1(%arg0: i32) -> (i32, i32) {
    %c0_i32 = arith.constant 0 : i32
    %c0_i32_0 = arith.constant 0 : i32
    %c0_i32_1 = arith.constant 0 : i32
    return %c0_i32, %c0_i32_0 : i32, i32
  }
  func.func @transform_2(%arg0: i32) -> (i32, i32) {
    %c0_i32 = arith.constant 0 : i32
    %c0_i32_0 = arith.constant 0 : i32
    %c0_i32_1 = arith.constant 0 : i32
    return %c0_i32, %c0_i32_0 : i32, i32
  }
  func.func @transform_3(%arg0: i32) -> (i32, i32) {
    %c0_i32 = arith.constant 0 : i32
    %c0_i32_0 = arith.constant 0 : i32
    %c0_i32_1 = arith.constant 0 : i32
    return %c0_i32, %c0_i32_0 : i32, i32
  }
  func.func @transform_4(%arg0: i32) -> (i32, i32) {
    %c0_i32 = arith.constant 0 : i32
    %c0_i32_0 = arith.constant 0 : i32
    %c0_i32_1 = arith.constant 0 : i32
    return %c0_i32, %c0_i32_0 : i32, i32
  }
  func.func @transform_5(%arg0: i32) -> (i32, i32) {
    %c0_i32 = arith.constant 0 : i32
    %c0_i32_0 = arith.constant 0 : i32
    return %arg0, %c0_i32 : i32, i32
  }
}

</mosaic_0001>

<llo_original>
// kernel: fcn_forward.1
$region0: #{fcn_forward.1}
  #allocation0 [shape = 'u32[]', space=smem, size = 0x4, offset = 0x4, fixed_abs, tag = 'smem constant byte address 0x4 - core index']
  #allocation1 [shape = 'u32[72,128]{1,0:T(1,128)}', space=vmem, size = 0x9000, scoped, tag = 'internal scratch']
  %s0 = inlined_call_operand.vmem [shape: f32[128,128], index: 0, kind: input, shape index: {}]
  %s1 = inlined_call_operand.vmem [shape: bf16[128,128], index: 1, kind: input, shape index: {}]
  %s2 = inlined_call_operand.vmem [shape: f32[1,128], index: 2, kind: input, shape index: {}]
  %s3 = inlined_call_operand.vmem [shape: bf16[128,16], index: 3, kind: input, shape index: {}]
  %s4 = inlined_call_operand.vmem [shape: f32[1,16], index: 4, kind: input, shape index: {}]
  %s5 = inlined_call_operand.vmem [shape: f32[128,16], index: 5, kind: output, shape index: {}]
  %s6 = sld [smem:[#allocation0]]
  $region30: #{fcn_forward.1} parent=0
    _
  %s8 = ssub.s32 1, %s6
  %s9 = scalar_select 0, %s8, %s6
  // Predicated region
  $region2: #{fcn_forward.1} parent=0 // pred_check
    _
  $region3: #{fcn_forward.1} parent=0 // pred_check_branch
    %11 = sbr.rel (0) target = $region5
  $region4: #{fcn_forward.1} parent=0 // pred_region
    _
  $region5: #{fcn_forward.1} parent=0 // pred_fallthru
    _
  // Predicated region
  $region6: #{fcn_forward.1} parent=0 // pred_check
    _
  $region7: #{fcn_forward.1} parent=0 // pred_check_branch
    %13 = sbr.rel (0) target = $region9
  $region8: #{fcn_forward.1} parent=0 // pred_region
    _
  $region9: #{fcn_forward.1} parent=0 // pred_fallthru
    _
  // Predicated region
  $region10: #{fcn_forward.1} parent=0 // pred_check
    _
  $region11: #{fcn_forward.1} parent=0 // pred_check_branch
    %15 = sbr.rel (0) target = $region13
  $region12: #{fcn_forward.1} parent=0 // pred_region
    _
  $region13: #{fcn_forward.1} parent=0 // pred_fallthru
    _
  // Predicated region
  $region14: #{fcn_forward.1} parent=0 // pred_check
    _
  $region15: #{fcn_forward.1} parent=0 // pred_check_branch
    %17 = sbr.rel (0) target = $region17
  $region16: #{fcn_forward.1} parent=0 // pred_region
    _
  $region17: #{fcn_forward.1} parent=0 // pred_fallthru
    _
  // Predicated region
  $region18: #{fcn_forward.1} parent=0 // pred_check
    _
  $region19: #{fcn_forward.1} parent=0 // pred_check_branch
    %19 = sbr.rel (0) target = $region21
  $region20: #{fcn_forward.1} parent=0 // pred_region
    _
  $region21: #{fcn_forward.1} parent=0 // pred_fallthru
    _
  %v20 = vld [vmem:[%s0] sm:$0xff]
  %v21 = vld [vmem:[%s0 + $0x8] sm:$0xff]
  %v22 = vld [vmem:[%s0 + $0x10] sm:$0xff]
  %v23 = vld [vmem:[%s0 + $0x18] sm:$0xff]
  %v24 = vld [vmem:[%s0 + $0x20] sm:$0xff]
  %v25 = vld [vmem:[%s0 + $0x28] sm:$0xff]
  %v26 = vld [vmem:[%s0 + $0x30] sm:$0xff]
  %v27 = vld [vmem:[%s0 + $0x38] sm:$0xff]
  %v28 = vld [vmem:[%s0 + $0x40] sm:$0xff]
  %v29 = vld [vmem:[%s0 + $0x48] sm:$0xff]
  %v30 = vld [vmem:[%s0 + $0x50] sm:$0xff]
  %v31 = vld [vmem:[%s0 + $0x58] sm:$0xff]
  %v32 = vld [vmem:[%s0 + $0x60] sm:$0xff]
  %v33 = vld [vmem:[%s0 + $0x68] sm:$0xff]
  %v34 = vld [vmem:[%s0 + $0x70] sm:$0xff]
  %v35 = vld [vmem:[%s0 + $0x78] sm:$0xff]
  %v36 = vpack.c.bf16 %v21, %v20
  %v37 = vpack.c.bf16 %v23, %v22
  %v38 = vpack.c.bf16 %v25, %v24
  %v39 = vpack.c.bf16 %v27, %v26
  %v40 = vpack.c.bf16 %v29, %v28
  %v41 = vpack.c.bf16 %v31, %v30
  %v42 = vpack.c.bf16 %v33, %v32
  %v43 = vpack.c.bf16 %v35, %v34
  %v44 = vld [vmem:[%s1] sm:$0xf]
  %v45 = vld [vmem:[%s1 + $0x4] sm:$0xf]
  %v46 = vld [vmem:[%s1 + $0x8] sm:$0xf]
  %v47 = vld [vmem:[%s1 + $0xc] sm:$0xf]
  %v48 = vld [vmem:[%s1 + $0x10] sm:$0xf]
  %v49 = vld [vmem:[%s1 + $0x14] sm:$0xf]
  %v50 = vld [vmem:[%s1 + $0x18] sm:$0xf]
  %v51 = vld [vmem:[%s1 + $0x1c] sm:$0xf]
  %v52 = vld [vmem:[%s1 + $0x20] sm:$0xf]
  %v53 = vld [vmem:[%s1 + $0x24] sm:$0xf]
  %v54 = vld [vmem:[%s1 + $0x28] sm:$0xf]
  %v55 = vld [vmem:[%s1 + $0x2c] sm:$0xf]
  %v56 = vld [vmem:[%s1 + $0x30] sm:$0xf]
  %v57 = vld [vmem:[%s1 + $0x34] sm:$0xf]
  %v58 = vld [vmem:[%s1 + $0x38] sm:$0xf]
  %v59 = vld [vmem:[%s1 + $0x3c] sm:$0xf]
  %v60 = vld [vmem:[%s2] sm:$0x1]
  %v62 = vperm.slane %v60, 0
  %v80 = vunpack.c.l.b16 %v44
  %v81 = vunpack.c.l.b16 %v45
  %v82 = vunpack.c.l.b16 %v46
  %v83 = vunpack.c.l.b16 %v47
  %v84 = vunpack.c.l.b16 %v48
  %v85 = vunpack.c.l.b16 %v49
  %v86 = vunpack.c.l.b16 %v50
  %v87 = vunpack.c.l.b16 %v51
  %v88 = vunpack.c.l.b16 %v52
  %v89 = vunpack.c.l.b16 %v53
  %v90 = vunpack.c.l.b16 %v54
  %v91 = vunpack.c.l.b16 %v55
  %v92 = vunpack.c.l.b16 %v56
  %v93 = vunpack.c.l.b16 %v57
  %v94 = vunpack.c.l.b16 %v58
  %v95 = vunpack.c.l.b16 %v59
  %v96 = vpack.c.b16 %v81, %v80
  %v97 = vpack.c.b16 %v83, %v82
  %v98 = vpack.c.b16 %v85, %v84
  %v99 = vpack.c.b16 %v87, %v86
  %v100 = vpack.c.b16 %v89, %v88
  %v101 = vpack.c.b16 %v91, %v90
  %v102 = vpack.c.b16 %v93, %v92
  %v103 = vpack.c.b16 %v95, %v94
  %112 = vmatpush.bf16.msra.mxu0 %v103
  %113 = vmatpush.bf16.msra.mxu0 %v102
  %114 = vmatpush.bf16.msra.mxu0 %v101
  %115 = vmatpush.bf16.msra.mxu0 %v100
  %116 = vmatpush.bf16.msra.mxu0 %v99
  %117 = vmatpush.bf16.msra.mxu0 %v98
  %118 = vmatpush.bf16.msra.mxu0 %v97
  %119 = vmatpush.bf16.msra.mxu0 %v96
  %120 = vmatmul.bf16.gmra.mxu0 %v36
  %v121 = vpop.f32.mrf.mxu0
  %v122 = vadd.f32 %v62, %v121
  %v123 = vpop.f32.mrf.mxu0
  %v124 = vadd.f32 %v62, %v123
  %125 = vmatmul.bf16.gmra.mxu0 %v37
  %v126 = vpop.f32.mrf.mxu0
  %v127 = vadd.f32 %v62, %v126
  %v128 = vpop.f32.mrf.mxu0
  %v129 = vadd.f32 %v62, %v128
  %130 = vmatmul.bf16.gmra.mxu0 %v38
  %v131 = vpop.f32.mrf.mxu0
  %v132 = vadd.f32 %v62, %v131
  %v133 = vpop.f32.mrf.mxu0
  %v134 = vadd.f32 %v62, %v133
  %135 = vmatmul.bf16.gmra.mxu0 %v39
  %v136 = vpop.f32.mrf.mxu0
  %v137 = vadd.f32 %v62, %v136
  %v138 = vpop.f32.mrf.mxu0
  %v139 = vadd.f32 %v62, %v138
  %140 = vmatmul.bf16.gmra.mxu0 %v40
  %v141 = vpop.f32.mrf.mxu0
  %v142 = vadd.f32 %v62, %v141
  %v143 = vpop.f32.mrf.mxu0
  %v144 = vadd.f32 %v62, %v143
  %145 = vmatmul.bf16.gmra.mxu0 %v41
  %v146 = vpop.f32.mrf.mxu0
  %v147 = vadd.f32 %v62, %v146
  %v148 = vpop.f32.mrf.mxu0
  %v149 = vadd.f32 %v62, %v148
  %150 = vmatmul.bf16.gmra.mxu0 %v42
  %v151 = vpop.f32.mrf.mxu0
  %v152 = vadd.f32 %v62, %v151
  %v153 = vpop.f32.mrf.mxu0
  %v154 = vadd.f32 %v62, %v153
  %155 = vmatmul.bf16.gmra.mxu0 %v43
  %v156 = vpop.f32.mrf.mxu0
  %v157 = vadd.f32 %v62, %v156
  %v158 = vpop.f32.mrf.mxu0
  %v159 = vadd.f32 %v62, %v158
  %160 = vdwg.mxu0
  %v161 = vmax.f32 %v122, 0.0
  %v162 = vmax.f32 %v124, 0.0
  %v163 = vmax.f32 %v127, 0.0
  %v164 = vmax.f32 %v129, 0.0
  %v165 = vmax.f32 %v132, 0.0
  %v166 = vmax.f32 %v134, 0.0
  %v167 = vmax.f32 %v137, 0.0
  %v168 = vmax.f32 %v139, 0.0
  %v169 = vmax.f32 %v142, 0.0
  %v170 = vmax.f32 %v144, 0.0
  %v171 = vmax.f32 %v147, 0.0
  %v172 = vmax.f32 %v149, 0.0
  %v173 = vmax.f32 %v152, 0.0
  %v174 = vmax.f32 %v154, 0.0
  %v175 = vmax.f32 %v157, 0.0
  %v176 = vmax.f32 %v159, 0.0
  %v177 = vpack.c.bf16 %v162, %v161
  %v178 = vpack.c.bf16 %v164, %v163
  %v179 = vpack.c.bf16 %v166, %v165
  %v180 = vpack.c.bf16 %v168, %v167
  %v181 = vpack.c.bf16 %v170, %v169
  %v182 = vpack.c.bf16 %v172, %v171
  %v183 = vpack.c.bf16 %v174, %v173
  %v184 = vpack.c.bf16 %v176, %v175
  %v185 = vld [vmem:[%s3] sm:$0xf]
  %v186 = vld [vmem:[%s3 + $0x4] sm:$0xf]
  %v187 = vld [vmem:[%s3 + $0x8] sm:$0xf]
  %v188 = vld [vmem:[%s3 + $0xc] sm:$0xf]
  %v189 = vld [vmem:[%s3 + $0x10] sm:$0xf]
  %v190 = vld [vmem:[%s3 + $0x14] sm:$0xf]
  %v191 = vld [vmem:[%s3 + $0x18] sm:$0xf]
  %v192 = vld [vmem:[%s3 + $0x1c] sm:$0xf]
  %v193 = vld [vmem:[%s3 + $0x20] sm:$0xf]
  %v194 = vld [vmem:[%s3 + $0x24] sm:$0xf]
  %v195 = vld [vmem:[%s3 + $0x28] sm:$0xf]
  %v196 = vld [vmem:[%s3 + $0x2c] sm:$0xf]
  %v197 = vld [vmem:[%s3 + $0x30] sm:$0xf]
  %v198 = vld [vmem:[%s3 + $0x34] sm:$0xf]
  %v199 = vld [vmem:[%s3 + $0x38] sm:$0xf]
  %v200 = vld [vmem:[%s3 + $0x3c] sm:$0xf]
  %v201 = vld [vmem:[%s4] sm:$0x1]
  %v203 = vperm.slane %v201, 0
  %v221 = vunpack.c.l.b16 %v185
  %v222 = vunpack.c.l.b16 %v186
  %v223 = vunpack.c.l.b16 %v187
  %v224 = vunpack.c.l.b16 %v188
  %v225 = vunpack.c.l.b16 %v189
  %v226 = vunpack.c.l.b16 %v190
  %v227 = vunpack.c.l.b16 %v191
  %v228 = vunpack.c.l.b16 %v192
  %v229 = vunpack.c.l.b16 %v193
  %v230 = vunpack.c.l.b16 %v194
  %v231 = vunpack.c.l.b16 %v195
  %v232 = vunpack.c.l.b16 %v196
  %v233 = vunpack.c.l.b16 %v197
  %v234 = vunpack.c.l.b16 %v198
  %v235 = vunpack.c.l.b16 %v199
  %v236 = vunpack.c.l.b16 %v200
  %v237 = vpack.c.b16 %v222, %v221
  %v238 = vpack.c.b16 %v224, %v223
  %v239 = vpack.c.b16 %v226, %v225
  %v240 = vpack.c.b16 %v228, %v227
  %v241 = vpack.c.b16 %v230, %v229
  %v242 = vpack.c.b16 %v232, %v231
  %v243 = vpack.c.b16 %v234, %v233
  %v244 = vpack.c.b16 %v236, %v235
  %253 = vmatpush.bf16.msra.mxu0 %v244
  %254 = vmatpush.bf16.msra.mxu0 %v243
  %255 = vmatpush.bf16.msra.mxu0 %v242
  %256 = vmatpush.bf16.msra.mxu0 %v241
  %257 = vmatpush.bf16.msra.mxu0 %v240
  %258 = vmatpush.bf16.msra.mxu0 %v239
  %259 = vmatpush.bf16.msra.mxu0 %v238
  %260 = vmatpush.bf16.msra.mxu0 %v237
  %261 = vmatmul.bf16.gmra.mxu0 %v177
  %v262 = vpop.f32.mrf.mxu0
  %v263 = vadd.f32 %v203, %v262
  %v264 = vpop.f32.mrf.mxu0
  %v265 = vadd.f32 %v203, %v264
  %266 = vmatmul.bf16.gmra.mxu0 %v178
  %v267 = vpop.f32.mrf.mxu0
  %v268 = vadd.f32 %v203, %v267
  %v269 = vpop.f32.mrf.mxu0
  %v270 = vadd.f32 %v203, %v269
  %271 = vmatmul.bf16.gmra.mxu0 %v179
  %v272 = vpop.f32.mrf.mxu0
  %v273 = vadd.f32 %v203, %v272
  %v274 = vpop.f32.mrf.mxu0
  %v275 = vadd.f32 %v203, %v274
  %276 = vmatmul.bf16.gmra.mxu0 %v180
  %v277 = vpop.f32.mrf.mxu0
  %v278 = vadd.f32 %v203, %v277
  %v279 = vpop.f32.mrf.mxu0
  %v280 = vadd.f32 %v203, %v279
  %281 = vmatmul.bf16.gmra.mxu0 %v181
  %v282 = vpop.f32.mrf.mxu0
  %v283 = vadd.f32 %v203, %v282
  %v284 = vpop.f32.mrf.mxu0
  %v285 = vadd.f32 %v203, %v284
  %286 = vmatmul.bf16.gmra.mxu0 %v182
  %v287 = vpop.f32.mrf.mxu0
  %v288 = vadd.f32 %v203, %v287
  %v289 = vpop.f32.mrf.mxu0
  %v290 = vadd.f32 %v203, %v289
  %291 = vmatmul.bf16.gmra.mxu0 %v183
  %v292 = vpop.f32.mrf.mxu0
  %v293 = vadd.f32 %v203, %v292
  %v294 = vpop.f32.mrf.mxu0
  %v295 = vadd.f32 %v203, %v294
  %296 = vmatmul.bf16.gmra.mxu0 %v184
  %v297 = vpop.f32.mrf.mxu0
  %v298 = vadd.f32 %v203, %v297
  %v299 = vpop.f32.mrf.mxu0
  %v300 = vadd.f32 %v203, %v299
  %301 = vdwg.mxu0
  %vm302 = vcmask 130048
  %303 = vst.msk [vmem:[%s5] sm:$0xff] %vm302, %v263
  %304 = vst.msk [vmem:[%s5 + $0x8] sm:$0xff] %vm302, %v265
  %305 = vst.msk [vmem:[%s5 + $0x10] sm:$0xff] %vm302, %v268
  %306 = vst.msk [vmem:[%s5 + $0x18] sm:$0xff] %vm302, %v270
  %307 = vst.msk [vmem:[%s5 + $0x20] sm:$0xff] %vm302, %v273
  %308 = vst.msk [vmem:[%s5 + $0x28] sm:$0xff] %vm302, %v275
  %309 = vst.msk [vmem:[%s5 + $0x30] sm:$0xff] %vm302, %v278
  %310 = vst.msk [vmem:[%s5 + $0x38] sm:$0xff] %vm302, %v280
  %311 = vst.msk [vmem:[%s5 + $0x40] sm:$0xff] %vm302, %v283
  %312 = vst.msk [vmem:[%s5 + $0x48] sm:$0xff] %vm302, %v285
  %313 = vst.msk [vmem:[%s5 + $0x50] sm:$0xff] %vm302, %v288
  %314 = vst.msk [vmem:[%s5 + $0x58] sm:$0xff] %vm302, %v290
  %315 = vst.msk [vmem:[%s5 + $0x60] sm:$0xff] %vm302, %v293
  %316 = vst.msk [vmem:[%s5 + $0x68] sm:$0xff] %vm302, %v295
  %317 = vst.msk [vmem:[%s5 + $0x70] sm:$0xff] %vm302, %v298
  %318 = vst.msk [vmem:[%s5 + $0x78] sm:$0xff] %vm302, %v300
  // Predicated region
  $region22: #{fcn_forward.1} parent=0 // pred_check
    _
  $region23: #{fcn_forward.1} parent=0 // pred_check_branch
    %320 = sbr.rel (0) target = $region25
  $region24: #{fcn_forward.1} parent=0 // pred_region
    _
  $region25: #{fcn_forward.1} parent=0 // pred_fallthru
    _
  // Predicated region
  $region26: #{fcn_forward.1} parent=0 // pred_check
    _
  $region27: #{fcn_forward.1} parent=0 // pred_check_branch
    %322 = sbr.rel (0) target = $region29
  $region28: #{fcn_forward.1} parent=0 // pred_region
    _
  $region29: #{fcn_forward.1} parent=0 // pred_fallthru
    _

</llo_original>
